<compile_context>
chip_gen: v6e
topology: v6e:2x2x1
jax: 0.10.0
libtpu: 0.0.40
codegen_flags: <defaults>
</compile_context>

<pallas_src>
import functools

import jax
import jax.numpy as jnp
from jax.experimental import pallas as pl
from jax.experimental.pallas import tpu as pltpu


def _round_up(x, m):
    return ((x + m - 1) // m) * m


def _cdiv(a, b):
    return (a + b - 1) // b


def _vmem_capacity_bytes():
    """Physical VMEM per TensorCore; assume the smallest (v7x, 64 MiB) if unknown."""
    try:
        return int(pltpu.get_tpu_info().vmem_capacity_bytes)
    except Exception:
        return 64 * 1024 * 1024


def quad_kernel(x_ref, w_ref, b_ref, o_ref, *, tn):
    """One packed bf16 MXU matmul (f32 accumulate), f32 bias add, fused l1*l2+ls tail."""
    x = x_ref[...].astype(jnp.bfloat16)
    y = jnp.dot(x, w_ref[...], preferred_element_type=jnp.float32)   # (tB, 3*tn)
    y = y + b_ref[...]                                                # f32 bias broadcast
    l1 = y[:, 0 * tn:1 * tn]                                          # static 128-aligned slices
    l2 = y[:, 1 * tn:2 * tn]
    ls = y[:, 2 * tn:3 * tn]
    o_ref[...] = (l1 * l2 + ls).astype(o_ref.dtype)


def pack_quad_params(w1, b1, w2, b2, ws, bs, *, max_block_n=512):
    """Fold the constant-1 feature into the biases (f32), pad O to a 128 multiple,
    interleave the three layers per output block, and cast weights to bf16.

    Weights are expected pre-transposed: (in_features+1, out_features).
    Call ONCE at parameter-prep time; pass the result to quad_layer_packed.
    Returns (w_packed, b_packed, meta).
    """
    F = w1.shape[0] - 1
    O = w1.shape[1]

    def fold(w, b):
        w = w.astype(jnp.float32)
        b = b.astype(jnp.float32).reshape(1, -1)
        return w[:-1, :], b + w[-1:, :]          # ones-column folded into bias, in f32

    w1f, b1f = fold(w1, b1)
    w2f, b2f = fold(w2, b2)
    wsf, bsf = fold(ws, bs)

    O_pad = _round_up(O, 128)
    # Output-block width: largest multiple of 128 that divides O_pad, <= max_block_n.
    n_chunks = O_pad // 128
    max_chunks = max(1, max_block_n // 128)
    c = 1
    for cand in range(min(n_chunks, max_chunks), 0, -1):
        if n_chunks % cand == 0:
            c = cand
            break
    tN = 128 * c
    nN = O_pad // tN

    def pad_o(a):
        return jnp.pad(a, ((0, 0), (0, O_pad - O)))

    def interleave(a1, a2, a3):
        # (L, O_pad) x3 -> (L, nN*3*tN): block j holds [a1_j | a2_j | a3_j]
        L = a1.shape[0]
        r = lambda a: a.reshape(L, nN, tN)
        return jnp.stack([r(a1), r(a2), r(a3)], axis=2).reshape(L, nN * 3 * tN)

    w_packed = interleave(pad_o(w1f), pad_o(w2f), pad_o(wsf)).astype(jnp.bfloat16)
    b_packed = interleave(pad_o(b1f), pad_o(b2f), pad_o(bsf))   # stays f32

    meta = dict(in_features=F, out_features=O, o_pad=O_pad, tn=tN, nn=nN)
    return w_packed, b_packed, meta


def quad_layer_packed(x, w_packed, b_packed, meta, *, max_tile_b=None):
    """QuadLayer forward from pre-packed parameters. x: (B, F) -> (B, O)."""
    B, F = x.shape
    assert F == meta["in_features"], "x feature dim does not match packed params"
    O = meta["out_features"]
    O_pad = meta["o_pad"]
    tN = meta["tn"]
    nN = meta["nn"]
    dtype = x.dtype

    vmem_cap = _vmem_capacity_bytes()
    if max_tile_b is None:
        # Bigger batch tiles on 128 MiB parts (v5e/v6e), smaller on v7x (64 MiB).
        max_tile_b = 1024 if vmem_cap >= 96 * 1024 * 1024 else 512

    # Batch tile: near-even split; force >=2 grid steps when B > 8 so the
    # "parallel" batch axis actually feeds both v7x TensorCores.
    if B <= 8:
        tB = B
    else:
        B8 = _round_up(B, 8)
        n_steps = max(_cdiv(B8, max_tile_b), 2)
        tB = _round_up(_cdiv(B8, n_steps), 8)

    def footprint(tb):
        return (3 * tb * F * 4                 # x tiles (f32, up to triple-buffered)
                + 2 * F * 3 * tN * 2           # weight slab (bf16, double-buffered)
                + 2 * 3 * tN * 4               # bias slab (f32)
                + 2 * tb * tN * 4              # out tiles (double-buffered)
                + 2 * tb * 3 * tN * 4)         # f32 matmul result + tail temporaries

    budget = int(0.70 * vmem_cap)
    while tB > 8 and footprint(tB) > budget:
        tB = max(8, _round_up(tB // 2, 8))

    grid_b = _cdiv(B, tB)
    grid = (grid_b, nN)

    vmem_limit = int(min(max(int(1.5 * footprint(tB)), 16 * 1024 * 1024),
                         int(0.90 * vmem_cap)))

    # Deeper buffering on the x stream hides DMA latency behind the short
    # matmul+VPU tail when F is small and there are enough grid steps.
    if F <= 256 and grid_b >= 3 and nN == 1:
        x_spec = pl.BlockSpec((tB, F), lambda i, j: (i, 0),
                              pipeline_mode=pl.Buffered(3))
    else:
        x_spec = pl.BlockSpec((tB, F), lambda i, j: (i, 0))

    cost = pl.CostEstimate(
        flops=2 * B * F * 3 * O_pad + 2 * B * O_pad,
        transcendentals=0,
        bytes_accessed=(x.size * x.dtype.itemsize
                        + w_packed.size * 2
                        + b_packed.size * 4
                        + B * O_pad * jnp.dtype(dtype).itemsize),
    )

    out = pl.pallas_call(
        functools.partial(quad_kernel, tn=tN),
        out_shape=jax.ShapeDtypeStruct((B, O_pad), dtype),
        grid=grid,
        in_specs=[
            x_spec,                                            # x tile, resident across N blocks
            pl.BlockSpec((F, 3 * tN), lambda i, j: (0, j)),    # interleaved bf16 weight slab
            pl.BlockSpec((1, 3 * tN), lambda i, j: (0, j)),    # f32 bias slab
        ],
        out_specs=pl.BlockSpec((tB, tN), lambda i, j: (i, j)), # lane-dense output tile
        compiler_params=pltpu.CompilerParams(
            dimension_semantics=("parallel", "parallel"),
            vmem_limit_bytes=vmem_limit,
        ),
        cost_estimate=cost,
    )(x, w_packed, b_packed)

    return out if O == O_pad else out[:, :O]


def quad_layer(x, w1, b1, w2, b2, ws, bs, **kwargs):
    """One-off convenience. For repeated calls, hoist pack_quad_params out of the loop."""
    w_packed, b_packed, meta = pack_quad_params(w1, b1, w2, b2, ws, bs)
    return quad_layer_packed(x, w_packed, b_packed, meta, **kwargs)


def init_linear_params(key, in_features, out_features, dtype=jnp.float32):
    """Deterministic init mimicking torch.nn.Linear: U(-1/sqrt(fan_in), 1/sqrt(fan_in)).

    Returns weight pre-transposed to (in_features, out_features) and bias (1, out_features).
    """
    kw, kb = jax.random.split(key)
    bound = 1.0 / jnp.sqrt(jnp.asarray(in_features, dtype))
    w = jax.random.uniform(kw, (in_features, out_features), dtype, -bound, bound)
    b = jax.random.uniform(kb, (1, out_features), dtype, -bound, bound)
    return w, b


def quad_layer_ref(x, w1, b1, w2, b2, ws, bs):
    """Pure-JAX f32 reference matching the PyTorch module exactly."""
    B = x.shape[0]
    x_pad = jnp.concatenate([x, jnp.ones((B, 1), dtype=x.dtype)], axis=-1)
    l1 = x_pad @ w1 + b1
    l2 = x_pad @ w2 + b2
    ls = x_pad @ ws + bs
    return l1 * l2 + ls


if __name__ == "__main__":
    key = jax.random.PRNGKey(0)
    k_x, k1, k2, k3 = jax.random.split(key, 4)

    batch = 8
    in_features = 32
    out_features = 32

    x = jax.random.normal(k_x, (batch, in_features), jnp.float32)
    w1, b1 = init_linear_params(k1, in_features + 1, out_features)
    w2, b2 = init_linear_params(k2, in_features + 1, out_features)
    ws, bs = init_linear_params(k3, in_features + 1, out_features)

    # Pack once (hoisted out of the per-call path), then reuse for every call.
    w_packed, b_packed, meta = pack_quad_params(w1, b1, w2, b2, ws, bs)
    w_packed, b_packed = jax.block_until_ready((w_packed, b_packed))

    fwd = jax.jit(lambda xx, wp, bp: quad_layer_packed(xx, wp, bp, meta))
    out = jax.block_until_ready(fwd(x, w_packed, b_packed))

    ref = quad_layer_ref(x, w1, b1, w2, b2, ws, bs)
    assert out.shape == (batch, out_features)
    # bf16 MXU inputs -> tolerances loosened vs the pure-f32 reference.
    assert jnp.allclose(out, ref, atol=5e-2, rtol=5e-2), "mismatch vs reference"

    print("KERNEL_OK")
</pallas_src>

<mosaic_0001>
module attributes {stable_mosaic.version = 11 : i64} {
  func.func @quad_kernel(%arg0: i32, %arg1: i32, %arg2: memref<8x32xf32, #tpu.memory_space<vmem>>, %arg3: memref<32x384xbf16, #tpu.memory_space<vmem>>, %arg4: memref<1x384xf32, #tpu.memory_space<vmem>>, %arg5: memref<8x128xf32, #tpu.memory_space<vmem>>) attributes {dimension_semantics = [#tpu.dimension_semantics<parallel>, #tpu.dimension_semantics<parallel>], iteration_bounds = array<i64: 1, 1>, scalar_prefetch = 0 : i64, scratch_operands = 0 : i64, tpu.core_type = #tpu.core_type<tc>, window_params = [{transform_indices = @transform_0, window_bounds = array<i64: 8, 32>}, {transform_indices = @transform_1, window_bounds = array<i64: 32, 384>}, {transform_indices = @transform_2, window_bounds = array<i64: 1, 384>}, {transform_indices = @transform_3, window_bounds = array<i64: 8, 128>}]} {
    %c0 = arith.constant 0 : index
    %c0_0 = arith.constant 0 : index
    %0 = vector.load %arg2[%c0, %c0_0] : memref<8x32xf32, #tpu.memory_space<vmem>>, vector<8x32xf32>
    %1 = arith.truncf %0 : vector<8x32xf32> to vector<8x32xbf16>
    %c0_1 = arith.constant 0 : index
    %c0_2 = arith.constant 0 : index
    %2 = vector.load %arg3[%c0_1, %c0_2] : memref<32x384xbf16, #tpu.memory_space<vmem>>, vector<32x384xbf16>
    %cst = arith.constant dense<0.000000e+00> : vector<8x384xf32>
    %3 = tpu.matmul %1, %2, %cst {dimension_numbers = #tpu.dot_dimension_numbers<[1], [0], [0], [1], [0, 0, 1, 1], [], []>} : vector<8x32xbf16>, vector<32x384xbf16>, vector<8x384xf32> -> vector<8x384xf32>
    %c0_3 = arith.constant 0 : index
    %c0_4 = arith.constant 0 : index
    %4 = vector.load %arg4[%c0_3, %c0_4] : memref<1x384xf32, #tpu.memory_space<vmem>>, vector<1x384xf32>
    %5 = vector.broadcast %4 : vector<1x384xf32> to vector<8x384xf32>
    %6 = arith.addf %3, %5 : vector<8x384xf32>
    %7 = vector.extract_strided_slice %6 {offsets = [0, 0], sizes = [8, 128], strides = [1, 1]} : vector<8x384xf32> to vector<8x128xf32>
    %8 = vector.extract_strided_slice %6 {offsets = [0, 128], sizes = [8, 128], strides = [1, 1]} : vector<8x384xf32> to vector<8x128xf32>
    %9 = vector.extract_strided_slice %6 {offsets = [0, 256], sizes = [8, 128], strides = [1, 1]} : vector<8x384xf32> to vector<8x128xf32>
    %10 = arith.mulf %7, %8 : vector<8x128xf32>
    %11 = arith.addf %10, %9 : vector<8x128xf32>
    %c0_5 = arith.constant 0 : index
    %c0_6 = arith.constant 0 : index
    %12 = vector.load %arg5[%c0_5, %c0_6] : memref<8x128xf32, #tpu.memory_space<vmem>>, vector<8x128xf32>
    tpu.vector_store %arg5[%c0_5, %c0_6], %11 {strides = array<i32>} : memref<8x128xf32, #tpu.memory_space<vmem>>, vector<8x128xf32>,
    return
  }
  func.func @transform_0(%arg0: i32, %arg1: i32) -> (i32, i32) {
    %c0_i32 = arith.constant 0 : i32
    %c0_i32_0 = arith.constant 0 : i32
    return %arg0, %c0_i32 : i32, i32
  }
  func.func @transform_1(%arg0: i32, %arg1: i32) -> (i32, i32) {
    %c0_i32 = arith.constant 0 : i32
    %c0_i32_0 = arith.constant 0 : i32
    return %c0_i32, %arg1 : i32, i32
  }
  func.func @transform_2(%arg0: i32, %arg1: i32) -> (i32, i32) {
    %c0_i32 = arith.constant 0 : i32
    %c0_i32_0 = arith.constant 0 : i32
    return %c0_i32, %arg1 : i32, i32
  }
  func.func @transform_3(%arg0: i32, %arg1: i32) -> (i32, i32) {
    %c0_i32 = arith.constant 0 : i32
    return %arg0, %arg1 : i32, i32
  }
}

</mosaic_0001>

<llo_original>
// kernel: _lambda_.1
$region0: #{_lambda_.1}
  #allocation0 [shape = 'u32[]', space=smem, size = 0x4, offset = 0x4, fixed_abs, tag = 'smem constant byte address 0x4 - core index']
  #allocation1 [shape = 'u32[144,128]{1,0:T(1,128)}', space=vmem, size = 0x12000, scoped, tag = 'internal scratch']
  %s0 = inlined_call_operand.hbm [shape: f32[8,32], index: 0, kind: input, shape index: {}]
  %s1 = inlined_call_operand.hbm [shape: bf16[32,384], index: 1, kind: input, shape index: {}]
  %s2 = inlined_call_operand.vmem [shape: f32[1,384], index: 2, kind: input, shape index: {}]
  %s3 = inlined_call_operand.hbm [shape: f32[8,128], index: 3, kind: output, shape index: {}]
  %s4 = sld [smem:[#allocation0]]
  $region30: #{_lambda_.1} parent=0
    _
  %s6 = ssub.s32 1, %s4
  %s7 = scalar_select 0, %s6, %s4
  $region1: #{_lambda_.1} parent=0
    #allocation2 [shape = 'u8[4096]{0}', space=vmem, size = 0x1000, scoped, tag = 'input window, operand 0, single buffered']
    #allocation3 [shape = 's32[1]{0}', space=sflag, size = 0x4, scoped, tag = 'scoped memory for _lambda_.1']
    #allocation4 [shape = 's32[1]{0}', space=sflag, size = 0x4, scoped, tag = 'scoped memory for _lambda_.1']
    #allocation5 [shape = 'u8[24576]{0}', space=vmem, size = 0x6000, scoped, tag = 'input window, operand 1, single buffered']
    #allocation6 [shape = 's32[1]{0}', space=sflag, size = 0x4, scoped, tag = 'scoped memory for _lambda_.1']
    #allocation7 [shape = 'u8[4096]{0}', space=vmem, size = 0x1000, scoped, tag = 'output window, operand 0, single buffered']
    %8 = vsyncpa [#allocation3], 0
    %9 = vsyncpa [#allocation6], 0
    %10 = vsyncpa [#allocation4], 0
    // Predicated region
    $region2: #{_lambda_.1} parent=1 // pred_check
      _
    $region3: #{_lambda_.1} parent=1 // pred_check_branch
      %12 = sbr.rel (0) target = $region5
    $region4: #{_lambda_.1} parent=1 // pred_region
      %s14 = ssub.s32 128, 128
      %15 = vsyncadd [#allocation3], %s14
      %s17 = sshll.u32 [#allocation2], 4
      %s18 = int_to_ptr.vmem [resolvable:$true] %s17
      %20 = dma.hbm_to_vmem [thread:$0]  %s0, 128, %s18, [#allocation3]
    $region5: #{_lambda_.1} parent=1 // pred_fallthru
      _
    // Predicated region
    $region6: #{_lambda_.1} parent=1 // pred_check
      _
    $region7: #{_lambda_.1} parent=1 // pred_check_branch
      %22 = sbr.rel (0) target = $region9
    $region8: #{_lambda_.1} parent=1 // pred_region
      %s24 = ssub.s32 768, 768
      %25 = vsyncadd [#allocation6], %s24
      %s26 = sshll.u32 [#allocation5], 4
      %s27 = int_to_ptr.vmem [resolvable:$true] %s26
      %32 = dma.hbm_to_vmem [thread:$0]  %s1, 768, %s27, [#allocation6], 192, 192, 12
    $region9: #{_lambda_.1} parent=1 // pred_fallthru
      _
    // Predicated region
    $region10: #{_lambda_.1} parent=1 // pred_check
      _
    $region11: #{_lambda_.1} parent=1 // pred_check_branch
      %34 = sbr.rel (0) target = $region13
    $region12: #{_lambda_.1} parent=1 // pred_region
      _
    $region13: #{_lambda_.1} parent=1 // pred_fallthru
      _
    // Predicated region
    $region14: #{_lambda_.1} parent=1 // pred_check
      _
    $region15: #{_lambda_.1} parent=1 // pred_check_branch
      %36 = sbr.rel (0) target = $region17
    $region16: #{_lambda_.1} parent=1 // pred_region
      %37 = dma.done [#allocation3], 128
    $region17: #{_lambda_.1} parent=1 // pred_fallthru
      _
    // Predicated region
    $region18: #{_lambda_.1} parent=1 // pred_check
      _
    $region19: #{_lambda_.1} parent=1 // pred_check_branch
      %39 = sbr.rel (0) target = $region21
    $region20: #{_lambda_.1} parent=1 // pred_region
      %40 = dma.done [#allocation6], 768
    $region21: #{_lambda_.1} parent=1 // pred_fallthru
      _
    %v42 = vld [vmem:[#allocation2] sm:$0xff]
    %v43 = vpack.c.bf16 %v42, %v42
    %v44 = vld [vmem:[#allocation5] sm:$0xff]
    %v45 = vld [vmem:[#allocation5 + $0x8] sm:$0xf]
    %v46 = vld [vmem:[#allocation5 + $0xc] sm:$0xff]
    %v47 = vld [vmem:[#allocation5 + $0x14] sm:$0xf]
    %v48 = vld [vmem:[#allocation5 + $0x18] sm:$0xff]
    %v49 = vld [vmem:[#allocation5 + $0x20] sm:$0xf]
    %v50 = vld [vmem:[#allocation5 + $0x24] sm:$0xff]
    %v51 = vld [vmem:[#allocation5 + $0x2c] sm:$0xf]
    %v52 = vld [vmem:[%s2] sm:$0x7]
    %v54 = vlaneseq
    %v55 = vshrl.u32 %v54, 7
    %v56 = vsub.s32 0, %v55
    %v57 = vrot.slane %v52, %v56
    %v58 = vlaneseq
    %v59 = vshrl.u32 %v58, 7
    %v60 = vsub.s32 1, %v59
    %v61 = vrot.slane %v52, %v60
    %v62 = vlaneseq
    %v63 = vshrl.u32 %v62, 7
    %v64 = vsub.s32 2, %v63
    %v65 = vrot.slane %v52, %v64
    %v77 = vunpack.c.l.b16 %v44
    %v78 = vunpack.c.h.b16 %v44
    %v79 = vunpack.c.l.b16 %v45
    %v80 = vunpack.c.l.b16 %v46
    %v81 = vunpack.c.h.b16 %v46
    %v82 = vunpack.c.l.b16 %v47
    %v83 = vunpack.c.l.b16 %v48
    %v84 = vunpack.c.h.b16 %v48
    %v85 = vunpack.c.l.b16 %v49
    %v86 = vunpack.c.l.b16 %v50
    %v87 = vunpack.c.h.b16 %v50
    %v88 = vunpack.c.l.b16 %v51
    %v89 = vpack.c.b16 %v80, %v77
    %v90 = vpack.c.b16 %v81, %v78
    %v91 = vpack.c.b16 %v82, %v79
    %v92 = vpack.c.b16 %v86, %v83
    %v93 = vpack.c.b16 %v87, %v84
    %v94 = vpack.c.b16 %v88, %v85
    %vm101 = vcmask 261120
    %v103 = vsel %vm101, %v43, 0
    %105 = vmatprep.subr.bf16.mxu0 0
    %106 = vmatpush1.bf16.msra.mxu0 0
    %107 = vmatprep.subr.bf16.mxu0 0
    %108 = vmatpush1.bf16.msra.mxu0 0
    %109 = vmatprep.subr.bf16.mxu0 0
    %110 = vmatpush1.bf16.msra.mxu0 0
    %111 = vmatprep.subr.bf16.mxu0 0
    %112 = vmatpush1.bf16.msra.mxu0 0
    %113 = vmatprep.subr.bf16.mxu0 0
    %114 = vmatpush1.bf16.msra.mxu0 0
    %115 = vmatprep.subr.bf16.mxu0 0
    %116 = vmatpush1.bf16.msra.mxu0 0
    %117 = vmatprep.subr.bf16.mxu0 %v93
    %118 = vmatpush1.bf16.msra.mxu0 %v92
    %119 = vmatprep.subr.bf16.mxu0 %v90
    %120 = vmatpush1.bf16.msra.mxu0 %v89
    %121 = vmatprep.subr.bf16.mxu0 0
    %122 = vmatpush2.bf16.msra.mxu0 0
    %123 = vmatprep.subr.bf16.mxu0 0
    %124 = vmatpush2.bf16.msra.mxu0 0
    %125 = vmatprep.subr.bf16.mxu0 0
    %126 = vmatpush2.bf16.msra.mxu0 0
    %127 = vmatprep.subr.bf16.mxu0 0
    %128 = vmatpush2.bf16.msra.mxu0 0
    %129 = vmatprep.subr.bf16.mxu0 0
    %130 = vmatpush2.bf16.msra.mxu0 0
    %131 = vmatprep.subr.bf16.mxu0 0
    %132 = vmatpush2.bf16.msra.mxu0 0
    %133 = vmatprep.subr.bf16.mxu0 0
    %134 = vmatpush2.bf16.msra.mxu0 0
    %135 = vmatprep.subr.bf16.mxu0 0
    %136 = vmatpush2.bf16.msra.mxu0 0
    %137 = vmatprep.mubr.bf16.mxu0 0
    %138 = vmatmul.mubr.bf16.gmra.mxu0 %v103
    %v139 = vpop.f32.mrf.mxu0
    %v140 = vadd.f32 %v57, %v139
    %v141 = vpop.f32.mrf.mxu0
    %v142 = vadd.f32 %v61, %v141
    %v143 = vpop.f32.mrf.mxu0
    %v144 = vpop.f32.mrf.mxu0
    %145 = vdwg.mxu0
    %146 = vmatprep.subr.bf16.mxu0 0
    %147 = vmatpush1.bf16.msra.mxu0 0
    %148 = vmatprep.subr.bf16.mxu0 0
    %149 = vmatpush1.bf16.msra.mxu0 0
    %150 = vmatprep.subr.bf16.mxu0 0
    %151 = vmatpush1.bf16.msra.mxu0 0
    %152 = vmatprep.subr.bf16.mxu0 0
    %153 = vmatpush1.bf16.msra.mxu0 0
    %154 = vmatprep.subr.bf16.mxu0 0
    %155 = vmatpush1.bf16.msra.mxu0 0
    %156 = vmatprep.subr.bf16.mxu0 0
    %157 = vmatpush1.bf16.msra.mxu0 0
    %158 = vmatprep.subr.bf16.mxu0 0
    %159 = vmatpush1.bf16.msra.mxu0 %v94
    %160 = vmatprep.subr.bf16.mxu0 0
    %161 = vmatpush1.bf16.msra.mxu0 %v91
    %162 = vmatprep.subr.bf16.mxu0 0
    %163 = vmatpush2.bf16.msra.mxu0 0
    %164 = vmatprep.subr.bf16.mxu0 0
    %165 = vmatpush2.bf16.msra.mxu0 0
    %166 = vmatprep.subr.bf16.mxu0 0
    %167 = vmatpush2.bf16.msra.mxu0 0
    %168 = vmatprep.subr.bf16.mxu0 0
    %169 = vmatpush2.bf16.msra.mxu0 0
    %170 = vmatprep.subr.bf16.mxu0 0
    %171 = vmatpush2.bf16.msra.mxu0 0
    %172 = vmatprep.subr.bf16.mxu0 0
    %173 = vmatpush2.bf16.msra.mxu0 0
    %174 = vmatprep.subr.bf16.mxu0 0
    %175 = vmatpush2.bf16.msra.mxu0 0
    %176 = vmatprep.subr.bf16.mxu0 0
    %177 = vmatpush2.bf16.msra.mxu0 0
    %178 = vmatprep.mubr.bf16.mxu0 0
    %179 = vmatmul.mubr.bf16.gmra.mxu0 %v103
    %v180 = vpop.f32.mrf.mxu0
    %v181 = vadd.f32 %v65, %v180
    %v182 = vpop.f32.mrf.mxu0
    %v183 = vpop.f32.mrf.mxu0
    %v184 = vpop.f32.mrf.mxu0
    %185 = vdwg.mxu0
    %v186 = vmul.f32 %v140, %v142
    %v187 = vadd.f32 %v186, %v181
    %188 = vst [vmem:[#allocation7] sm:$0xff] %v187
    // Predicated region
    $region22: #{_lambda_.1} parent=1 // pred_check
      _
    $region23: #{_lambda_.1} parent=1 // pred_check_branch
      %190 = sbr.rel (0) target = $region25
    $region24: #{_lambda_.1} parent=1 // pred_region
      %s192 = ssub.s32 128, 128
      %193 = vsyncadd [#allocation4], %s192
      %s195 = sshll.u32 [#allocation7], 4
      %s196 = int_to_ptr.vmem [resolvable:$true] %s195
      %198 = dma.vmem_to_hbm [thread:$0]  %s196, 128, %s3, [#allocation4]
    $region25: #{_lambda_.1} parent=1 // pred_fallthru
      _
    // Predicated region
    $region26: #{_lambda_.1} parent=1 // pred_check
      _
    $region27: #{_lambda_.1} parent=1 // pred_check_branch
      %200 = sbr.rel (0) target = $region29
    $region28: #{_lambda_.1} parent=1 // pred_region
      %201 = dma.done [#allocation4], 128
    $region29: #{_lambda_.1} parent=1 // pred_fallthru
      _
    %202 = vsyncpa [#allocation3], 1
    %203 = vsyncpa [#allocation6], 1
    %204 = vsyncpa [#allocation4], 1

</llo_original>
